<compile_context>
chip_gen: v7x
topology: tpu7x:2x2x1
jax: 0.10.0
libtpu: 0.0.40
codegen_flags: <defaults>
</compile_context>

<pallas_src>
import math
import functools

import jax
import jax.numpy as jnp
from jax.experimental import pallas as pl
from jax.experimental.pallas import tpu as pltpu

_LOG_2PI = math.log(2.0 * math.pi)

# Widest lane-dense slab width we aim for (multiple of 128).
_WIDE_LANES = 2048


def _round_up(x, m):
    return ((x + m - 1) // m) * m


def _cdiv(a, b):
    return -(-a // b)


@functools.lru_cache(maxsize=1)
def _vmem_limit_bytes():
    """Scoped-VMEM limit to request; evaluated lazily on the target backend."""
    cap = 64 * 1024 * 1024  # conservative fallback (v7x-sized physical VMEM)
    try:
        cap = int(pltpu.get_tpu_info().vmem_capacity_bytes)
    except Exception:
        pass
    return int(min(max(cap // 2, 16 * 1024 * 1024), 64 * 1024 * 1024))


def _tile_budget_bytes():
    # Half the requested scoped-VMEM limit for all double-buffered tiles.
    return _vmem_limit_bytes() // 2


# ---------------------------------------------------------------------------
# Kernels (elementwise hot paths).  All upcast to f32 in-register and store in
# the output ref's dtype.
# ---------------------------------------------------------------------------
def _log_density_kernel(sample_ref, mu_ref, logsigma_ref, out_ref):
    s = sample_ref[...].astype(jnp.float32)
    mu = mu_ref[...].astype(jnp.float32)
    ls = logsigma_ref[...].astype(jnp.float32)
    t = (s - mu) * jnp.exp(-ls)
    out_ref[...] = (-0.5 * (t * t + 2.0 * ls + _LOG_2PI)).astype(out_ref.dtype)


def _log_density_prior_kernel(sample_ref, out_ref, *, mu, logsigma):
    # mu / logsigma are Python floats baked in at trace time (scalar prior):
    # single input stream, no broadcast materialization in HBM.
    s = sample_ref[...].astype(jnp.float32)
    inv_sigma = math.exp(-logsigma)
    t = (s - mu) * inv_sigma
    out_ref[...] = (-0.5 * (t * t + (2.0 * logsigma + _LOG_2PI))).astype(out_ref.dtype)


def _kld_kernel(mu_ref, logsigma_ref, out_ref):
    mu = mu_ref[...].astype(jnp.float32)
    ls = logsigma_ref[...].astype(jnp.float32)
    # single exp(2*ls) instead of exp(ls)*exp(ls)
    out_ref[...] = (-0.5 * (2.0 * ls + 1.0 - mu * mu - jnp.exp(2.0 * ls))).astype(out_ref.dtype)


def _kld_prior_kernel(mu_ref, ls_ref, mup_ref, lsp_ref, out_ref):
    # Array-prior path (mu_p / logsigma_p are full tensors).
    mu = mu_ref[...].astype(jnp.float32)
    ls = ls_ref[...].astype(jnp.float32)
    mup = mup_ref[...].astype(jnp.float32)
    lsp = lsp_ref[...].astype(jnp.float32)
    d = mu - mup
    kld = 2.0 * (ls - lsp) + 1.0 - (d * d + jnp.exp(2.0 * ls)) * jnp.exp(-2.0 * lsp)
    out_ref[...] = (-0.5 * kld).astype(out_ref.dtype)


def _kld_prior_scalar_kernel(mu_ref, ls_ref, out_ref, *, mu_p, logsigma_p):
    # Scalar-prior fast path: mu_p / exp(-2*logsigma_p) baked as constants.
    # 2 input streams instead of 4, one exp per element instead of two.
    mu = mu_ref[...].astype(jnp.float32)
    ls = ls_ref[...].astype(jnp.float32)
    inv_sp2 = math.exp(-2.0 * logsigma_p)
    d = mu - mu_p
    kld = 2.0 * (ls - logsigma_p) + 1.0 - (d * d + jnp.exp(2.0 * ls)) * inv_sp2
    out_ref[...] = (-0.5 * kld).astype(out_ref.dtype)


def _nll_kernel(mu_ref, logsigma_ref, smu_ref, slogsigma_ref, out_ref):
    mu = mu_ref[...].astype(jnp.float32)
    ls = logsigma_ref[...].astype(jnp.float32)
    smu = smu_ref[...].astype(jnp.float32)
    sls = slogsigma_ref[...].astype(jnp.float32)
    d = smu - mu
    nll = jnp.exp(-2.0 * ls) * d * d + jnp.exp(2.0 * (sls - ls)) + 2.0 * ls + _LOG_2PI
    out_ref[...] = (0.5 * nll).astype(out_ref.dtype)


def _nll_self_kernel(logsigma_ref, out_ref):
    # sample_params is None -> (smu - mu) == 0 and exp(2*sls - 2*ls) == 1.
    ls = logsigma_ref[...].astype(jnp.float32)
    out_ref[...] = (0.5 * (1.0 + 2.0 * ls + _LOG_2PI)).astype(out_ref.dtype)


def _logdensity_kld_kernel(sample_ref, mu_ref, logsigma_ref, ld_ref, kld_ref):
    # Fused VAE path: one HBM read of (sample, mu, logsigma), two outputs,
    # a single exp per element (exp(2*ls) derived from exp(-ls) via rcp).
    s = sample_ref[...].astype(jnp.float32)
    mu = mu_ref[...].astype(jnp.float32)
    ls = logsigma_ref[...].astype(jnp.float32)
    em = jnp.exp(-ls)
    t = (s - mu) * em
    ld_ref[...] = (-0.5 * (t * t + 2.0 * ls + _LOG_2PI)).astype(ld_ref.dtype)
    e2 = pl.reciprocal(em * em, approx=False)       # == exp(2*ls)
    kld_ref[...] = (-0.5 * (2.0 * ls + 1.0 - mu * mu - e2)).astype(kld_ref.dtype)


# ---------------------------------------------------------------------------
# Generic elementwise runner: lane-dense (rows, cw) slab, row tiling by VMEM
# byte budget, ragged row tiles handled by grid-edge masking (no pad/crop
# unless n has no divisor >= 128).
# ---------------------------------------------------------------------------
def _pick_cw(n):
    """Largest divisor of n that fits in one lane-dense row (<= 2048).

    Prefers multiples of 128 (fully unmasked stores); otherwise any divisor
    >= 128 (block last dim == full dim, so still a contiguous DMA per block).
    Returns 0 if no suitable divisor exists (-> pad fallback).
    """
    if n <= _WIDE_LANES:
        return n
    for cw in range(_WIDE_LANES, 127, -128):      # lane-aligned divisors first
        if n % cw == 0:
            return cw
    for cw in range(_WIDE_LANES, 127, -1):        # any divisor >= 128
        if n % cw == 0:
            return cw
    return 0


def _run_elementwise(kernel, xs, n_out=1, out_dtype=None):
    xs = [jnp.asarray(x) for x in xs]
    orig_shape = xs[0].shape
    if out_dtype is None:
        out_dtype = jnp.result_type(*xs)

    n = int(math.prod(orig_shape))
    if n == 0:
        outs = tuple(jnp.zeros(orig_shape, out_dtype) for _ in range(n_out))
        return outs[0] if n_out == 1 else outs

    # ---- lane-dense slab layout (no pad in the common case) ---------------
    cw = _pick_cw(n)
    if cw > 0:
        rows = n // cw
        slabs = [x.reshape(rows, cw) for x in xs]          # free reshapes
        padded = False
    else:
        # Last resort (e.g. prime n): pad the flat tail, crop the output.
        cw = _WIDE_LANES
        rows = _cdiv(n, cw)
        slabs = [jnp.pad(x.reshape(-1), (0, rows * cw - n)).reshape(rows, cw)
                 for x in xs]
        padded = True

    # ---- row tile sized by VMEM byte budget (real itemsizes) --------------
    in_bytes = sum(x.dtype.itemsize for x in xs)
    out_bytes = n_out * jnp.dtype(out_dtype).itemsize
    bytes_per_row = cw * (in_bytes + out_bytes)
    budget_rows = max(8, _tile_budget_bytes() // (2 * bytes_per_row))  # x2: double-buffered

    if rows <= 8:
        tr = rows                                   # block == full sublane dim
    else:
        tr = min(budget_rows, rows)
        # Guarantee several grid steps so the DMA pipeline overlaps and the
        # grid can shard across TensorCores (>= 2 steps per core on v7x).
        if rows >= 32:
            tr = min(tr, _round_up(_cdiv(rows, 4), 8))
        elif rows >= 16:
            tr = min(tr, _round_up(_cdiv(rows, 2), 8))
        tr = max(8, (tr // 8) * 8)                  # (8, 128)-aligned block
    grid = (_cdiv(rows, tr),)

    spec = pl.BlockSpec((tr, cw), lambda i: (i, 0))
    out_sds = tuple(jax.ShapeDtypeStruct((rows, cw), out_dtype) for _ in range(n_out))

    outs = pl.pallas_call(
        kernel,
        out_shape=out_sds if n_out > 1 else out_sds[0],
        grid=grid,
        in_specs=[spec] * len(slabs),
        out_specs=tuple([spec] * n_out) if n_out > 1 else spec,
        compiler_params=pltpu.CompilerParams(
            dimension_semantics=("parallel",),
            vmem_limit_bytes=_vmem_limit_bytes()),
    )(*slabs)

    if n_out == 1:
        outs = (outs,)
    results = []
    for o in outs:
        if padded:
            o = o.reshape(-1)[:n]
        results.append(o.reshape(orig_shape))
    return results[0] if n_out == 1 else tuple(results)


# ---------------------------------------------------------------------------
# Jitted entry points (split + reshape + pallas_call compile as one program).
# ---------------------------------------------------------------------------
def _split(params):
    # Pre-split (mu, logsigma) tuples skip the stride-2 de-interleave pass.
    if isinstance(params, (tuple, list)):
        return jnp.asarray(params[0]), jnp.asarray(params[1])
    params = jnp.asarray(params)
    return params[..., 0], params[..., 1]


@jax.jit
def _log_density_jit(sample, params):
    mu, ls = _split(params)
    shape = jnp.broadcast_shapes(sample.shape, mu.shape)
    sample = jnp.broadcast_to(sample, shape)
    mu = jnp.broadcast_to(mu, shape)
    ls = jnp.broadcast_to(ls, shape)
    return _run_elementwise(_log_density_kernel, [sample, mu, ls])


@functools.partial(jax.jit, static_argnums=(1, 2))
def _log_density_prior_jit(sample, mu, logsigma):
    kern = functools.partial(_log_density_prior_kernel, mu=mu, logsigma=logsigma)
    return _run_elementwise(kern, [sample])


@jax.jit
def _kld_jit(params):
    mu, ls = _split(params)
    return _run_elementwise(_kld_kernel, [mu, ls])


@functools.partial(jax.jit, static_argnums=(1, 2))
def _kld_prior_scalar_jit(params, mu_p, logsigma_p):
    mu, ls = _split(params)
    kern = functools.partial(_kld_prior_scalar_kernel, mu_p=mu_p, logsigma_p=logsigma_p)
    return _run_elementwise(kern, [mu, ls])


@jax.jit
def _kld_prior_array_jit(params, mu_p, logsigma_p):
    mu, ls = _split(params)
    mu_p = jnp.broadcast_to(jnp.asarray(mu_p, mu.dtype), mu.shape)
    logsigma_p = jnp.broadcast_to(jnp.asarray(logsigma_p, ls.dtype), ls.shape)
    return _run_elementwise(_kld_prior_kernel, [mu, ls, mu_p, logsigma_p])


@jax.jit
def _nll_jit(params, sample_params):
    mu, ls = _split(params)
    smu, sls = _split(sample_params)
    shape = jnp.broadcast_shapes(mu.shape, smu.shape)
    mu = jnp.broadcast_to(mu, shape)
    ls = jnp.broadcast_to(ls, shape)
    smu = jnp.broadcast_to(smu, shape)
    sls = jnp.broadcast_to(sls, shape)
    return _run_elementwise(_nll_kernel, [mu, ls, smu, sls])


@jax.jit
def _nll_self_jit(params):
    _, ls = _split(params)
    return _run_elementwise(_nll_self_kernel, [ls])


@jax.jit
def _log_density_and_kld_jit(sample, params):
    mu, ls = _split(params)
    shape = jnp.broadcast_shapes(sample.shape, mu.shape)
    sample = jnp.broadcast_to(sample, shape)
    mu = jnp.broadcast_to(mu, shape)
    ls = jnp.broadcast_to(ls, shape)
    return _run_elementwise(_logdensity_kld_kernel, [sample, mu, ls], n_out=2)


def _maybe_float(v):
    """Return float(v) for concrete Python / 0-d scalars, else None."""
    if isinstance(v, (int, float)):
        return float(v)
    try:
        if jnp.ndim(v) == 0:
            return float(v)          # raises on tracers -> caught below
    except Exception:
        pass
    return None


# ---------------------------------------------------------------------------
# JAX/Pallas port of the Normal module
# ---------------------------------------------------------------------------
class NormalPallas:
    """JAX/Pallas port of lib/dist.py::Normal."""

    def __init__(self, mu=0.0, sigma=1.0):
        self._mu = float(mu)
        self._logsigma = float(math.log(sigma))
        self.mu = jnp.asarray([self._mu], jnp.float32)
        self.logsigma = jnp.asarray([self._logsigma], jnp.float32)
        self.normalization = jnp.asarray([_LOG_2PI], jnp.float32)

    # ---- distribution ops (Pallas kernels) -------------------------------
    def log_density(self, sample, params=None):
        sample = jnp.asarray(sample)
        if params is None:
            return _log_density_prior_jit(sample, self._mu, self._logsigma)
        return _log_density_jit(sample, params)

    def kld(self, params):
        return _kld_jit(params)

    def kld_prior(self, params, mu_p, logsigma_p):
        mp = _maybe_float(mu_p)
        lp = _maybe_float(logsigma_p)
        if mp is not None and lp is not None:
            return _kld_prior_scalar_jit(params, mp, lp)
        return _kld_prior_array_jit(params, mu_p, logsigma_p)

    def NLL(self, params, sample_params=None):
        if sample_params is None:
            return _nll_self_jit(params)
        return _nll_jit(params, sample_params)

    def log_density_and_kld(self, sample, params):
        """Fused path for VAE-style losses: one pallas_call, two outputs."""
        return _log_density_and_kld_jit(jnp.asarray(sample), params)

    # TODO(synk): sample() needs torch.randn-style Gaussian draws; doable with
    # pltpu.prng_seed + pltpu.stateful_normal in-kernel; omitted here.

    def get_params(self):
        return jnp.concatenate([self.mu, self.logsigma])

    @property
    def nparams(self):
        return 2

    @property
    def ndim(self):
        return 1

    @property
    def is_reparameterizable(self):
        return True

    def forward(self, x):
        # Matches the PyTorch module: forward is a no-op.
        return None


# ---------------------------------------------------------------------------
# Pure-JAX references for verification
# ---------------------------------------------------------------------------
def _ref_log_density(sample, mu, logsigma):
    t = (sample - mu) * jnp.exp(-logsigma)
    return -0.5 * (t * t + 2.0 * logsigma + _LOG_2PI)


def _ref_kld(mu, logsigma):
    return -0.5 * (2.0 * logsigma + 1.0 - mu ** 2 - jnp.exp(logsigma) ** 2)


def _ref_kld_prior(mu, logsigma, mu_p, logsigma_p):
    sigma_p2 = jnp.exp(logsigma_p) ** 2
    kld = (2.0 * (logsigma - logsigma_p) + 1.0
           - ((mu - mu_p) ** 2 + jnp.exp(logsigma) ** 2) / sigma_p2)
    return -0.5 * kld


def _ref_nll(mu, logsigma, smu, slogsigma):
    return 0.5 * (jnp.exp(-2.0 * logsigma) * (smu - mu) ** 2
                  + jnp.exp(2.0 * slogsigma - 2.0 * logsigma)
                  + 2.0 * logsigma + _LOG_2PI)


if __name__ == "__main__":
    key = jax.random.PRNGKey(0)
    k1, k2, k3, k4 = jax.random.split(key, 4)

    # Small latent-code shapes (batch=8, hidden=32).
    B, D = 8, 32
    params = jax.random.normal(k1, (B, D, 2), jnp.float32) * 0.5   # (mu, logsigma)
    sample = jax.random.normal(k2, (B, D), jnp.float32)
    sparams = jax.random.normal(k3, (B, D, 2), jnp.float32) * 0.5

    dist = NormalPallas()

    ld = dist.log_density(sample, params)
    ld_prior = dist.log_density(sample)                 # scalar-prior fast path
    kl = dist.kld(params)
    nll_self = dist.NLL(params)                         # 1-input fast path
    nll = dist.NLL(params, sparams)
    klp_scalar = dist.kld_prior(params, 0.3, -0.2)      # scalar-prior fast path
    mu_p = 0.3 * jnp.ones((B, D), jnp.float32)
    ls_p = -0.2 * jnp.ones((B, D), jnp.float32)
    klp_arr = dist.kld_prior(params, mu_p, ls_p)        # array-prior path
    ld_f, kl_f = dist.log_density_and_kld(sample, params)   # fused path

    mu, ls = params[..., 0], params[..., 1]
    kl_tuple = dist.kld((mu, ls))                       # pre-split params fast path

    # Medium, ragged element count (300*70 = 21000): exercises the divisor-slab
    # layout (cw = 1750, no pad/crop) and the masked row-tile grid edge.
    params_m = jax.random.normal(k4, (300, 70, 2), jnp.float32) * 0.5
    sample_m = jax.random.normal(k2, (300, 70), jnp.float32)
    ld_m = dist.log_density(sample_m, params_m)
    kl_m = dist.kld(params_m)

    jax.block_until_ready((ld, ld_prior, kl, nll_self, nll, klp_scalar, klp_arr,
                           ld_f, kl_f, kl_tuple, ld_m, kl_m))

    smu, sls = sparams[..., 0], sparams[..., 1]
    mu_m, ls_m = params_m[..., 0], params_m[..., 1]

    tol = dict(atol=1e-5, rtol=1e-5)
    assert ld.shape == (B, D) and kl.shape == (B, D) and nll.shape == (B, D)
    assert jnp.allclose(ld, _ref_log_density(sample, mu, ls), **tol)
    assert jnp.allclose(ld_prior, _ref_log_density(sample, 0.0, 0.0), **tol)
    assert jnp.allclose(kl, _ref_kld(mu, ls), **tol)
    assert jnp.allclose(kl_tuple, _ref_kld(mu, ls), **tol)
    assert jnp.allclose(nll_self, _ref_nll(mu, ls, mu, ls), **tol)
    assert jnp.allclose(nll, _ref_nll(mu, ls, smu, sls), **tol)
    assert jnp.allclose(klp_scalar, _ref_kld_prior(mu, ls, 0.3, -0.2), **tol)
    assert jnp.allclose(klp_arr, _ref_kld_prior(mu, ls, 0.3, -0.2), **tol)
    assert jnp.allclose(ld_f, _ref_log_density(sample, mu, ls), **tol)
    assert jnp.allclose(kl_f, _ref_kld(mu, ls), **tol)
    assert jnp.allclose(ld_m, _ref_log_density(sample_m, mu_m, ls_m), **tol)
    assert jnp.allclose(kl_m, _ref_kld(mu_m, ls_m), **tol)

    print("KERNEL_OK")
</pallas_src>

<mosaic_0001>
module attributes {stable_mosaic.version = 11 : i64} {
  func.func @_log_density_kernel(%arg0: i32, %arg1: memref<1x256xf32, #tpu.memory_space<vmem>>, %arg2: memref<1x256xf32, #tpu.memory_space<vmem>>, %arg3: memref<1x256xf32, #tpu.memory_space<vmem>>, %arg4: memref<1x256xf32, #tpu.memory_space<vmem>>) attributes {dimension_semantics = [#tpu.dimension_semantics<parallel>], iteration_bounds = array<i64: 1>, scalar_prefetch = 0 : i64, scratch_operands = 0 : i64, tpu.core_type = #tpu.core_type<tc>, window_params = [{transform_indices = @transform_0, window_bounds = array<i64: 1, 256>}, {transform_indices = @transform_1, window_bounds = array<i64: 1, 256>}, {transform_indices = @transform_2, window_bounds = array<i64: 1, 256>}, {transform_indices = @transform_3, window_bounds = array<i64: 1, 256>}]} {
    %c0 = arith.constant 0 : index
    %c0_0 = arith.constant 0 : index
    %0 = vector.load %arg1[%c0, %c0_0] : memref<1x256xf32, #tpu.memory_space<vmem>>, vector<1x256xf32>
    %c0_1 = arith.constant 0 : index
    %c0_2 = arith.constant 0 : index
    %1 = vector.load %arg2[%c0_1, %c0_2] : memref<1x256xf32, #tpu.memory_space<vmem>>, vector<1x256xf32>
    %c0_3 = arith.constant 0 : index
    %c0_4 = arith.constant 0 : index
    %2 = vector.load %arg3[%c0_3, %c0_4] : memref<1x256xf32, #tpu.memory_space<vmem>>, vector<1x256xf32>
    %3 = arith.subf %0, %1 : vector<1x256xf32>
    %cst = arith.constant 0.000000e+00 : f32
    %4 = vector.broadcast %cst : f32 to vector<1x256xf32>
    %5 = arith.subf %4, %2 : vector<1x256xf32>
    %6 = math.exp %5 : vector<1x256xf32>
    %7 = arith.mulf %3, %6 : vector<1x256xf32>
    %8 = arith.mulf %7, %7 : vector<1x256xf32>
    %cst_5 = arith.constant 2.000000e+00 : f32
    %9 = vector.broadcast %cst_5 : f32 to vector<1x256xf32>
    %10 = arith.mulf %9, %2 : vector<1x256xf32>
    %11 = arith.addf %8, %10 : vector<1x256xf32>
    %cst_6 = arith.constant 1.83787704 : f32
    %12 = vector.broadcast %cst_6 : f32 to vector<1x256xf32>
    %13 = arith.addf %11, %12 : vector<1x256xf32>
    %cst_7 = arith.constant -5.000000e-01 : f32
    %14 = vector.broadcast %cst_7 : f32 to vector<1x256xf32>
    %15 = arith.mulf %14, %13 : vector<1x256xf32>
    %c0_8 = arith.constant 0 : index
    %c0_9 = arith.constant 0 : index
    %16 = vector.load %arg4[%c0_8, %c0_9] : memref<1x256xf32, #tpu.memory_space<vmem>>, vector<1x256xf32>
    tpu.vector_store %arg4[%c0_8, %c0_9], %15 {strides = array<i32>} : memref<1x256xf32, #tpu.memory_space<vmem>>, vector<1x256xf32>,
    return
  }
  func.func @transform_0(%arg0: i32) -> (i32, i32) {
    %c0_i32 = arith.constant 0 : i32
    %c0_i32_0 = arith.constant 0 : i32
    return %arg0, %c0_i32 : i32, i32
  }
  func.func @transform_1(%arg0: i32) -> (i32, i32) {
    %c0_i32 = arith.constant 0 : i32
    %c0_i32_0 = arith.constant 0 : i32
    return %arg0, %c0_i32 : i32, i32
  }
  func.func @transform_2(%arg0: i32) -> (i32, i32) {
    %c0_i32 = arith.constant 0 : i32
    %c0_i32_0 = arith.constant 0 : i32
    return %arg0, %c0_i32 : i32, i32
  }
  func.func @transform_3(%arg0: i32) -> (i32, i32) {
    %c0_i32 = arith.constant 0 : i32
    %c0_i32_0 = arith.constant 0 : i32
    return %arg0, %c0_i32 : i32, i32
  }
}

</mosaic_0001>

<llo_original>
// kernel: squeeze.2
$region0: #{squeeze.2}
  %s0 = inlined_call_operand.vmem [shape: f32[8,32], index: 0, kind: input, shape index: {}]
  %s1 = inlined_call_operand.vmem [shape: f32[1,256], index: 1, kind: output, shape index: {}]
  $region1: #{squeeze.2} parent=0
    #allocation0 [shape = 'u8[8192]{0}', space=vmem, size = 0x2000, scoped, tag = 'scoped mem for output reshape']
    %s2 = smov 3
    %v3 = vld [vmem:[%s0] ss:$4 sm:%s2]
    %vm4 = vcmask 261120
    %5 = vst.msk [vmem:[#allocation0] ss:$8 sm:$0x3] %vm4, %v3
    %s6 = scalar_lea.vmem %s0, 3
    %s7 = smov 3
    %v8 = vld [vmem:[%s6] ss:$4 sm:%s7]
    %9 = vrot.lane.b32.xlu0 %v8, 96
    %v10 = vpop.permute.xlu0 %9
    %vm11 = vcmask 1048320
    %12 = vst.msk [vmem:[#allocation0] ss:$8 sm:$0x3] %vm11, %v10
    %s13 = scalar_lea.vmem %s0, 2
    %s14 = smov 3
    %v15 = vld [vmem:[%s13] ss:$4 sm:%s14]
    %16 = vrot.lane.b32.xlu0 %v15, 64
    %v17 = vpop.permute.xlu0 %16
    %vm18 = vcmask 785920
    %19 = vst.msk [vmem:[#allocation0] ss:$8 sm:$0x3] %vm18, %v17
    %s20 = scalar_lea.vmem %s0, 1
    %s21 = smov 3
    %v22 = vld [vmem:[%s20] ss:$4 sm:%s21]
    %23 = vrot.lane.b32.xlu0 %v22, 32
    %v24 = vpop.permute.xlu0 %23
    %vm25 = vcmask 523520
    %26 = vst.msk [vmem:[#allocation0] ss:$8 sm:$0x3] %vm25, %v24
    %s28 = sshllo.u32 0, 1
    %v30 = vld [vmem:[#allocation0] sm:%s28]
    %s31 = sshllo.u32 0, 1
    %32 = vst [vmem:[%s1] sm:%s31] %v30
    %s33 = scalar_lea.vmem [#allocation0], 8
    %v34 = vld [vmem:[%s33] sm:%s28]
    %s35 = sshllo.u32 0, 1
    %s36 = scalar_lea.vmem %s1, 1
    %37 = vst [vmem:[%s36] sm:%s35] %v34

// kernel: _log_density_jit.1
$region0: #{_log_density_jit.1}
  #allocation0 [shape = 'u32[]', space=smem, size = 0x4, offset = 0x4, fixed_abs, tag = 'smem constant byte address 0x4 - core index']
  #allocation1 [shape = 'u32[144,128]{1,0:T(1,128)}', space=vmem, size = 0x12000, scoped, tag = 'internal scratch']
  %s0 = inlined_call_operand.vmem [shape: f32[1,256], index: 0, kind: input, shape index: {}]
  %s1 = inlined_call_operand.vmem [shape: f32[1,256], index: 1, kind: input, shape index: {}]
  %s2 = inlined_call_operand.vmem [shape: f32[1,256], index: 2, kind: input, shape index: {}]
  %s3 = inlined_call_operand.vmem [shape: f32[1,256], index: 3, kind: output, shape index: {}]
  %s4 = sld [smem:[#allocation0]]
  $region22: #{_log_density_jit.1} parent=0
    _
  %s6 = ssub.s32 1, %s4
  %s7 = scalar_select 0, %s6, %s4
  // Predicated region
  $region2: #{_log_density_jit.1} parent=0 // pred_check
    _
  $region3: #{_log_density_jit.1} parent=0 // pred_check_branch
    %9 = sbr.rel (0) target = $region5
  $region4: #{_log_density_jit.1} parent=0 // pred_region
    _
  $region5: #{_log_density_jit.1} parent=0 // pred_fallthru
    _
  // Predicated region
  $region6: #{_log_density_jit.1} parent=0 // pred_check
    _
  $region7: #{_log_density_jit.1} parent=0 // pred_check_branch
    %11 = sbr.rel (0) target = $region9
  $region8: #{_log_density_jit.1} parent=0 // pred_region
    _
  $region9: #{_log_density_jit.1} parent=0 // pred_fallthru
    _
  // Predicated region
  $region10: #{_log_density_jit.1} parent=0 // pred_check
    _
  $region11: #{_log_density_jit.1} parent=0 // pred_check_branch
    %13 = sbr.rel (0) target = $region13
  $region12: #{_log_density_jit.1} parent=0 // pred_region
    _
  $region13: #{_log_density_jit.1} parent=0 // pred_fallthru
    _
  %v14 = vld [vmem:[%s0] sm:$0x3]
  %v15 = vld [vmem:[%s1] sm:$0x3]
  %v16 = vld [vmem:[%s2] sm:$0x3]
  %v17 = vsub.f32 %v14, %v15
  %v18 = vsub.f32 0.0, %v16
  %v19 = vmul.f32 %v18, 1.442695
  %v20 = vpow.pop %v19
  %v21 = vmul.f32 %v17, %v20
  %v22 = vmul.f32 %v21, %v21
  %v23 = vmul.f32 %v16, 2.0
  %v24 = vadd.f32 %v22, %v23
  %v25 = vadd.f32 %v24, 1.837877
  %v26 = vmul.f32 %v25, -0.5
  %v27 = vlaneseq
  %vm28 = vcmp.ge.s32.totalorder %v27, 0
  %vm29 = vcmp.lt.s32.totalorder %v27, 256
  %vm30 = vmand %vm28, %vm29
  %31 = vst.msk [vmem:[%s3] sm:$0x3] %vm30, %v26
  // Predicated region
  $region14: #{_log_density_jit.1} parent=0 // pred_check
    _
  $region15: #{_log_density_jit.1} parent=0 // pred_check_branch
    %33 = sbr.rel (0) target = $region17
  $region16: #{_log_density_jit.1} parent=0 // pred_region
    _
  $region17: #{_log_density_jit.1} parent=0 // pred_fallthru
    _
  // Predicated region
  $region18: #{_log_density_jit.1} parent=0 // pred_check
    _
  $region19: #{_log_density_jit.1} parent=0 // pred_check_branch
    %35 = sbr.rel (0) target = $region21
  $region20: #{_log_density_jit.1} parent=0 // pred_region
    _
  $region21: #{_log_density_jit.1} parent=0 // pred_fallthru
    _

</llo_original>
